<compile_context>
chip_gen: v7x
topology: tpu7x:2x2x1
jax: 0.10.0
libtpu: 0.0.40
codegen_flags: <defaults>
</compile_context>

<pallas_src>
import jax
import jax.numpy as jnp
from jax import lax
from jax.experimental import pallas as pl
from jax.experimental.pallas import tpu as pltpu


def _round_up(a, m):
    return (a + m - 1) // m * m


def _pick_tk(H, max_tk):
    """Largest multiple-of-128 divisor of H that is <= max_tk, else H."""
    if H <= max_tk:
        return H
    for cand in range(max_tk, 127, -128):
        if cand % 128 == 0 and H % cand == 0:
            return cand
    # TODO(synk): if the concatenated hidden size is large and not a multiple
    # of 128, pad it upstream (in the hidden-state concat) instead.
    return H


def _estimate_vmem_bytes(tm, S, tk, l_pad):
    """Rough double-buffered VMEM footprint, with headroom, capped for v7x."""
    sp = _round_up(S, 8)            # sublane padding of the (S, tk) slabs
    tkp = _round_up(tk, 128)        # lane padding
    x_b = 2 * tm * sp * tkp * 4     # x tile, f32, double-buffered
    w_b = 2 * _round_up(tk, 16) * l_pad * 2
    b_b = 2 * 8 * l_pad * 4
    m_b = 2 * tm * 128 * 4          # (tm, 1) mask pads to a full lane tile
    o_b = 2 * tm * l_pad * 4
    acc = tm * l_pad * 4
    need = x_b + w_b + b_b + m_b + o_b + acc
    return int(min(56 * 1024 * 1024,
                   max(16 * 1024 * 1024, 2 * need + 8 * 1024 * 1024)))


def _head_kernel(tile_valid_ref, fetch_idx_ref, x_ref, w_ref, b_ref, m_ref,
                 o_ref, acc_ref):
    """Fused absmax-over-subtokens + linear head + length mask.

    Grid: (token tiles, hidden chunks).  Refs:
      tile_valid_ref : SMEM (num_tiles,) i32 -- # valid rows per token tile
      fetch_idx_ref  : SMEM (num_tiles,) i32 -- last valid tile index <= i
      x_ref          : VMEM (tm, S, tk) f32  -- subtoken embeddings (native)
      w_ref          : VMEM (tk, l_pad) bf16
      b_ref          : VMEM (1, l_pad)  f32
      m_ref          : VMEM (tm, 1)     f32  -- per-row validity (0/1)
      o_ref          : VMEM (tm, l_pad) f32  -- lane-dense logits tile
      acc_ref        : VMEM (tm, l_pad) f32  -- H-reduction accumulator
    """
    i = pl.program_id(0)
    k = pl.program_id(1)
    nk = pl.num_programs(1)

    @pl.when(k == 0)
    def _init():
        acc_ref[...] = jnp.zeros_like(acc_ref)

    @pl.when(tile_valid_ref[i] > 0)
    def _compute():
        # Sign-preserving absmax across subtokens, done in f32 (native on all
        # generations; no bf16 VPU needed on v5e).
        x = x_ref[...]                                   # (tm, S, tk) f32
        mx = jnp.max(x, axis=1)
        mn = jnp.min(x, axis=1)
        agg = jnp.where(mx >= -mn, mx, mn)               # (tm, tk) f32
        # Cast only the aggregated slab to bf16 for the MXU; accumulate f32.
        acc_ref[...] += jnp.dot(agg.astype(jnp.bfloat16), w_ref[...],
                                preferred_element_type=jnp.float32)

    @pl.when(k == nk - 1)
    def _finalize():
        logits = acc_ref[...] + b_ref[...]
        # Select (not multiply): stale / OOB rows can never leak NaN or Inf.
        o_ref[...] = jnp.where(m_ref[...] > 0.0, logits, 0.0).astype(o_ref.dtype)


def model_forward(x, x_lens, w, bias, *, tm=128, max_tk=512):
    """x: (B, T, S, H) f32, x_lens: (B,) i32, w: (H, L) f32, bias: (1, L) f32.

    Returns logits of shape (B, T, L) f32, zeroed for padded word-tokens.
    """
    B, T, S, H = x.shape
    L = w.shape[1]
    N = B * T

    # Token-tile rows: sublane aligned, and >= 2 tiles when possible so the
    # "parallel" grid axis can be sharded across v7x's two TensorCores.
    tm = min(tm, _round_up(N, 8))
    if pl.cdiv(N, tm) < 2 and N > 8:
        tm = _round_up(pl.cdiv(N, 2), 8)
    num_tiles = pl.cdiv(N, tm)
    n_pad = num_tiles * tm

    tk = _pick_tk(H, max_tk)        # hidden-chunk width (VMEM scales with tk)
    num_k = pl.cdiv(H, tk)
    l_pad = _round_up(L, 128)       # lane-dense output stores

    # ---- wrapper side: only cheap / tiny arrays are touched ----
    # x stays in HBM untouched: (B,T,S,H) -> (N,S,H) is a free contiguous view.
    x_nsh = x.reshape(N, S, H)

    w_bf = jnp.pad(w.astype(jnp.bfloat16), ((0, 0), (0, l_pad - L)))
    b_f32 = jnp.pad(bias.astype(jnp.float32), ((0, 0), (0, l_pad - L)))

    # Per-row validity (t < x_lens[b]) flattened over (B, T), padded to n_pad.
    row_mask = (jnp.arange(T, dtype=jnp.int32)[None, :]
                < x_lens[:, None]).reshape(N)
    row_mask = jnp.pad(row_mask.astype(jnp.float32), (0, n_pad - N))
    mask_in = row_mask.reshape(n_pad, 1)

    # Scalar-prefetched per-tile valid count (skip compute of padded tiles)
    # and fetch_idx = last valid tile index <= i (skip their HBM DMA too:
    # Pallas does not re-issue a copy when the block index is unchanged).
    tile_valid = row_mask.reshape(num_tiles, tm).sum(axis=1).astype(jnp.int32)
    cand = jnp.where(tile_valid > 0,
                     jnp.arange(num_tiles, dtype=jnp.int32), -1)
    fetch_idx = jnp.maximum(lax.cummax(cand, axis=0), 0).astype(jnp.int32)

    def _clamped_k(k, tv_i):
        valid = (tv_i > 0).astype(jnp.int32)
        return valid * k + (1 - valid) * (num_k - 1)

    def x_map(i, k, tv, fi):
        # Padded tile -> reuse the previous step's block (no new DMA).
        return (fi[i], 0, _clamped_k(k, tv[i]))

    def w_map(i, k, tv, fi):
        return (_clamped_k(k, tv[i]), 0)

    grid_spec = pltpu.PrefetchScalarGridSpec(
        num_scalar_prefetch=2,                      # tile_valid, fetch_idx
        grid=(num_tiles, num_k),
        in_specs=[
            pl.BlockSpec((tm, S, tk), x_map),
            pl.BlockSpec((tk, l_pad), w_map),
            pl.BlockSpec((1, l_pad), lambda i, k, tv, fi: (0, 0)),
            pl.BlockSpec((tm, 1),    lambda i, k, tv, fi: (i, 0)),
        ],
        out_specs=pl.BlockSpec((tm, l_pad), lambda i, k, tv, fi: (i, 0)),
        scratch_shapes=[pltpu.VMEM((tm, l_pad), jnp.float32)],
    )

    out_pad = pl.pallas_call(
        _head_kernel,
        out_shape=jax.ShapeDtypeStruct((n_pad, l_pad), jnp.float32),
        grid_spec=grid_spec,
        compiler_params=pltpu.CompilerParams(
            dimension_semantics=("parallel", "arbitrary"),
            vmem_limit_bytes=_estimate_vmem_bytes(tm, S, tk, l_pad)),
    )(tile_valid, fetch_idx, x_nsh, w_bf, b_f32, mask_in)

    return out_pad[:N, :L].reshape(B, T, L)


if __name__ == "__main__":
    # Small shapes consistent with the forward pass:
    #   B sentences, T word-tokens, S subtokens per word, H (concatenated)
    #   hidden size, L output labels from model_head.
    # H=256 with max_tk=128 exercises the H-reduction accumulator path.
    B, T, S, H, L = 2, 8, 4, 256, 8

    key = jax.random.PRNGKey(0)
    kx, kw, kb = jax.random.split(key, 3)

    # Synthetic "BERT hidden states, cat'd over hidden_ids" per subtoken.
    x = jax.random.normal(kx, (B, T, S, H), dtype=jnp.float32)
    # Sentence lengths in word-tokens (as produced by _collate(with_lens=True)).
    x_lens = jnp.array([T, T - 3], dtype=jnp.int32)

    # Deterministic model_head parameters (synthetic, no checkpoint load).
    w = jax.random.normal(kw, (H, L), dtype=jnp.float32) * 0.05
    bias = jax.random.normal(kb, (1, L), dtype=jnp.float32) * 0.01

    out = model_forward(x, x_lens, w, bias, max_tk=128)
    jax.block_until_ready(out)

    # Reference in plain JAX, mirroring the kernel numerics:
    # f32 absmax, bf16 matmul inputs, f32 accumulation, masked select.
    mx = jnp.max(x, axis=2)
    mn = jnp.min(x, axis=2)
    agg = jnp.where(mx >= -mn, mx, mn)                         # (B, T, H) f32
    ref = jnp.einsum("bth,hl->btl", agg.astype(jnp.bfloat16),
                     w.astype(jnp.bfloat16),
                     preferred_element_type=jnp.float32) + bias[None]
    mask = jnp.arange(T)[None, :, None] < x_lens[:, None, None]
    ref = jnp.where(mask, ref, 0.0)

    assert out.shape == (B, T, L)
    assert jnp.allclose(out, ref, atol=1e-2, rtol=1e-2), "mismatch vs reference"

    # TODO(synk): tokenizer / BERT encoder / ragged subtoken grouping from
    # BertDataset.transform are external-model glue and not part of the kernel.
    print("KERNEL_OK")
</pallas_src>

<mosaic_0001>
module attributes {stable_mosaic.version = 11 : i64} {
  func.func @_head_kernel(%arg0: i32, %arg1: i32, %arg2: memref<2xi32, #tpu.memory_space<smem>>, %arg3: memref<2xi32, #tpu.memory_space<smem>>, %arg4: memref<8x4x128xf32, #tpu.memory_space<vmem>>, %arg5: memref<128x128xbf16, #tpu.memory_space<vmem>>, %arg6: memref<1x128xf32, #tpu.memory_space<vmem>>, %arg7: memref<8x1xf32, #tpu.memory_space<vmem>>, %arg8: memref<8x128xf32, #tpu.memory_space<vmem>>, %arg9: memref<8x128xf32, #tpu.memory_space<vmem>>) attributes {dimension_semantics = [#tpu.dimension_semantics<parallel>, #tpu.dimension_semantics<arbitrary>], iteration_bounds = array<i64: 2, 2>, scalar_prefetch = 2 : i64, scratch_operands = 1 : i64, tpu.core_type = #tpu.core_type<tc>, window_params = [{transform_indices = @transform_0, window_bounds = array<i64: 8, 4, 128>}, {transform_indices = @transform_1, window_bounds = array<i64: 128, 128>}, {pipeline_mode = #tpu.pipeline_mode<synchronous>, transform_indices = @transform_2, window_bounds = array<i64: 1, 128>}, {transform_indices = @transform_3, window_bounds = array<i64: 8, 1>}, {transform_indices = @transform_4, window_bounds = array<i64: 8, 128>}]} {
    %c0_i32 = arith.constant 0 : i32
    %0 = arith.cmpi eq, %arg1, %c0_i32 : i32
    %1 = arith.extui %0 : i1 to i32
    %c0_i32_0 = arith.constant 0 : i32
    %2 = arith.cmpi ne, %1, %c0_i32_0 : i32
    scf.if %2 {
      %cst = arith.constant 0.000000e+00 : f32
      %11 = vector.broadcast %cst : f32 to vector<8x128xf32>
      %c0 = arith.constant 0 : index
      %c0_4 = arith.constant 0 : index
      %12 = vector.load %arg9[%c0, %c0_4] : memref<8x128xf32, #tpu.memory_space<vmem>>, vector<8x128xf32>
      tpu.vector_store %arg9[%c0, %c0_4], %11 {strides = array<i32>} : memref<8x128xf32, #tpu.memory_space<vmem>>, vector<8x128xf32>,
    } else {
    }
    %3 = arith.index_cast %arg0 : i32 to index
    %4 = memref.load %arg2[%3] : memref<2xi32, #tpu.memory_space<smem>>
    %c0_i32_1 = arith.constant 0 : i32
    %5 = arith.cmpi sgt, %4, %c0_i32_1 : i32
    %6 = arith.extui %5 : i1 to i32
    %c0_i32_2 = arith.constant 0 : i32
    %7 = arith.cmpi ne, %6, %c0_i32_2 : i32
    scf.if %7 {
      %c0 = arith.constant 0 : index
      %c0_4 = arith.constant 0 : index
      %c0_5 = arith.constant 0 : index
      %11 = vector.load %arg4[%c0, %c0_4, %c0_5] : memref<8x4x128xf32, #tpu.memory_space<vmem>>, vector<8x4x128xf32>
      %cst = arith.constant dense<0xFF800000> : vector<8x128xf32>
      %12 = vector.multi_reduction <maximumf>, %11, %cst [1] : vector<8x4x128xf32> to vector<8x128xf32>
      %cst_6 = arith.constant dense<0x7F800000> : vector<8x128xf32>
      %13 = vector.multi_reduction <minimumf>, %11, %cst_6 [1] : vector<8x4x128xf32> to vector<8x128xf32>
      %cst_7 = arith.constant 0.000000e+00 : f32
      %14 = vector.broadcast %cst_7 : f32 to vector<8x128xf32>
      %15 = arith.subf %14, %13 : vector<8x128xf32>
      %16 = arith.cmpf oge, %12, %15 : vector<8x128xf32>
      %17 = arith.select %16, %12, %13 : vector<8x128xi1>, vector<8x128xf32>
      %c0_8 = arith.constant 0 : index
      %c0_9 = arith.constant 0 : index
      %18 = vector.load %arg9[%c0_8, %c0_9] : memref<8x128xf32, #tpu.memory_space<vmem>>, vector<8x128xf32>
      %19 = arith.truncf %17 : vector<8x128xf32> to vector<8x128xbf16>
      %c0_10 = arith.constant 0 : index
      %c0_11 = arith.constant 0 : index
      %20 = vector.load %arg5[%c0_10, %c0_11] : memref<128x128xbf16, #tpu.memory_space<vmem>>, vector<128x128xbf16>
      %cst_12 = arith.constant dense<0.000000e+00> : vector<8x128xf32>
      %21 = tpu.matmul %19, %20, %cst_12 {dimension_numbers = #tpu.dot_dimension_numbers<[1], [0], [0], [1], [0, 0, 1, 1], [], []>} : vector<8x128xbf16>, vector<128x128xbf16>, vector<8x128xf32> -> vector<8x128xf32>
      %22 = arith.addf %18, %21 : vector<8x128xf32>
      %c0_13 = arith.constant 0 : index
      %c0_14 = arith.constant 0 : index
      %23 = vector.load %arg9[%c0_13, %c0_14] : memref<8x128xf32, #tpu.memory_space<vmem>>, vector<8x128xf32>
      tpu.vector_store %arg9[%c0_13, %c0_14], %22 {strides = array<i32>} : memref<8x128xf32, #tpu.memory_space<vmem>>, vector<8x128xf32>,
    } else {
    }
    %c1_i32 = arith.constant 1 : i32
    %8 = arith.cmpi eq, %arg1, %c1_i32 : i32
    %9 = arith.extui %8 : i1 to i32
    %c0_i32_3 = arith.constant 0 : i32
    %10 = arith.cmpi ne, %9, %c0_i32_3 : i32
    scf.if %10 {
      %c0 = arith.constant 0 : index
      %c0_4 = arith.constant 0 : index
      %11 = vector.load %arg9[%c0, %c0_4] : memref<8x128xf32, #tpu.memory_space<vmem>>, vector<8x128xf32>
      %c0_5 = arith.constant 0 : index
      %c0_6 = arith.constant 0 : index
      %12 = vector.load %arg6[%c0_5, %c0_6] : memref<1x128xf32, #tpu.memory_space<vmem>>, vector<1x128xf32>
      %13 = vector.broadcast %12 : vector<1x128xf32> to vector<8x128xf32>
      %14 = arith.addf %11, %13 : vector<8x128xf32>
      %c0_7 = arith.constant 0 : index
      %c0_8 = arith.constant 0 : index
      %15 = vector.load %arg7[%c0_7, %c0_8] : memref<8x1xf32, #tpu.memory_space<vmem>>, vector<8x1xf32>
      %cst = arith.constant 0.000000e+00 : f32
      %16 = vector.broadcast %cst : f32 to vector<8x1xf32>
      %17 = arith.cmpf ogt, %15, %16 : vector<8x1xf32>
      %cst_9 = arith.constant 0.000000e+00 : f32
      %18 = vector.shape_cast %17 : vector<8x1xi1> to vector<8x1xi1>
      %19 = vector.broadcast %18 : vector<8x1xi1> to vector<8x128xi1>
      %20 = vector.broadcast %cst_9 : f32 to vector<8x128xf32>
      %21 = arith.select %19, %14, %20 : vector<8x128xi1>, vector<8x128xf32>
      %c0_10 = arith.constant 0 : index
      %c0_11 = arith.constant 0 : index
      %22 = vector.load %arg8[%c0_10, %c0_11] : memref<8x128xf32, #tpu.memory_space<vmem>>, vector<8x128xf32>
      tpu.vector_store %arg8[%c0_10, %c0_11], %21 {strides = array<i32>} : memref<8x128xf32, #tpu.memory_space<vmem>>, vector<8x128xf32>,
    } else {
    }
    return
  }
  func.func @transform_0(%arg0: i32, %arg1: i32, %arg2: memref<2xi32, #tpu.memory_space<smem>>, %arg3: memref<2xi32, #tpu.memory_space<smem>>) -> (i32, i32, i32) {
    %0 = arith.index_cast %arg0 : i32 to index
    %1 = memref.load %arg3[%0] : memref<2xi32, #tpu.memory_space<smem>>
    %2 = arith.index_cast %arg0 : i32 to index
    %3 = memref.load %arg2[%2] : memref<2xi32, #tpu.memory_space<smem>>
    %c0_i32 = arith.constant 0 : i32
    %4 = arith.cmpi sgt, %3, %c0_i32 : i32
    %5 = arith.extui %4 : i1 to i32
    %6 = arith.muli %5, %arg1 : i32
    %c1_i32 = arith.constant 1 : i32
    %7 = arith.subi %c1_i32, %5 : i32
    %c1_i32_0 = arith.constant 1 : i32
    %8 = arith.muli %7, %c1_i32_0 : i32
    %9 = arith.addi %6, %8 : i32
    %c0_i32_1 = arith.constant 0 : i32
    %c0_i32_2 = arith.constant 0 : i32
    return %1, %c0_i32_1, %9 : i32, i32, i32
  }
  func.func @transform_1(%arg0: i32, %arg1: i32, %arg2: memref<2xi32, #tpu.memory_space<smem>>, %arg3: memref<2xi32, #tpu.memory_space<smem>>) -> (i32, i32) {
    %0 = arith.index_cast %arg0 : i32 to index
    %1 = memref.load %arg2[%0] : memref<2xi32, #tpu.memory_space<smem>>
    %c0_i32 = arith.constant 0 : i32
    %2 = arith.cmpi sgt, %1, %c0_i32 : i32
    %3 = arith.extui %2 : i1 to i32
    %4 = arith.muli %3, %arg1 : i32
    %c1_i32 = arith.constant 1 : i32
    %5 = arith.subi %c1_i32, %3 : i32
    %c1_i32_0 = arith.constant 1 : i32
    %6 = arith.muli %5, %c1_i32_0 : i32
    %7 = arith.addi %4, %6 : i32
    %c0_i32_1 = arith.constant 0 : i32
    %c0_i32_2 = arith.constant 0 : i32
    return %7, %c0_i32_1 : i32, i32
  }
  func.func @transform_2(%arg0: i32, %arg1: i32, %arg2: memref<2xi32, #tpu.memory_space<smem>>, %arg3: memref<2xi32, #tpu.memory_space<smem>>) -> (i32, i32) {
    %c0_i32 = arith.constant 0 : i32
    %c0_i32_0 = arith.constant 0 : i32
    %c0_i32_1 = arith.constant 0 : i32
    return %c0_i32, %c0_i32_0 : i32, i32
  }
  func.func @transform_3(%arg0: i32, %arg1: i32, %arg2: memref<2xi32, #tpu.memory_space<smem>>, %arg3: memref<2xi32, #tpu.memory_space<smem>>) -> (i32, i32) {
    %c0_i32 = arith.constant 0 : i32
    %c0_i32_0 = arith.constant 0 : i32
    return %arg0, %c0_i32 : i32, i32
  }
  func.func @transform_4(%arg0: i32, %arg1: i32, %arg2: memref<2xi32, #tpu.memory_space<smem>>, %arg3: memref<2xi32, #tpu.memory_space<smem>>) -> (i32, i32) {
    %c0_i32 = arith.constant 0 : i32
    %c0_i32_0 = arith.constant 0 : i32
    return %arg0, %c0_i32 : i32, i32
  }
}

</mosaic_0001>

<llo_original>
// kernel: tpu_custom_call.1
$region0: #{tpu_custom_call.1}
  #allocation0 [shape = 'u32[]', space=smem, size = 0x4, offset = 0x4, fixed_abs, tag = 'smem constant byte address 0x4 - core index']
  #allocation1 [shape = 'u32[144,128]{1,0:T(1,128)}', space=vmem, size = 0x12000, scoped, tag = 'internal scratch']
  #allocation2 [shape = 'f32[8,128]{1,0:T(8,128)}', space=vmem, size = 0x1000, scoped, tag = 'scratch operand']
  #allocation3 [shape = 's32[1]{0}', space=sflag, size = 0x4, scoped, tag = 'scoped memory for tpu_custom_call.1']
  #allocation4 [shape = 'u8[512]{0}', space=smem, size = 0x200, scoped, tag = 'prefetched SMEM operand 0']
  #allocation5 [shape = 'u8[512]{0}', space=smem, size = 0x200, scoped, tag = 'prefetched SMEM operand 1']
  %s0 = inlined_call_operand.vmem [shape: s32[2], index: 0, kind: input, shape index: {}]
  %s1 = inlined_call_operand.vmem [shape: s32[2], index: 1, kind: input, shape index: {}]
  %s2 = inlined_call_operand.hbm [shape: f32[16,4,256], index: 2, kind: input, shape index: {}]
  %s3 = inlined_call_operand.hbm [shape: bf16[256,128], index: 3, kind: input, shape index: {}]
  %s4 = inlined_call_operand.vmem [shape: f32[1,128], index: 4, kind: input, shape index: {}]
  %s5 = inlined_call_operand.vmem [shape: f32[16,1], index: 5, kind: input, shape index: {}]
  %s6 = inlined_call_operand.hbm [shape: f32[16,128], index: 6, kind: output, shape index: {}]
  %s7 = sld [smem:[#allocation0]]
  $region69: #{tpu_custom_call.1} parent=0
    _
  %s9 = ssub.s32 1, %s7
  %s10 = scalar_select 0, %s9, %s7
  %s11 = sshll.u32 %s0, 4
  %s12 = int_to_ptr.vmem [resolvable:$true] %s11
  %14 = dma.vmem_to_smem %s12, 16, [#allocation4], [#allocation3]
  %s15 = sshll.u32 %s1, 4
  %s16 = int_to_ptr.vmem [resolvable:$true] %s15
  %18 = dma.vmem_to_smem %s16, 16, [#allocation5], [#allocation3]
  %19 = dma.done [#allocation3], 32
  %20 = sfence
  $region1: #{tpu_custom_call.1} parent=0
    #allocation6 [shape = 'u8[32768]{0}', space=vmem, size = 0x8000, scoped, tag = 'input window, operand 2']
    #allocation7 [shape = 's32[2]{0}', space=sflag, size = 0x8, scoped, tag = 'scoped memory for tpu_custom_call.1']
    #allocation8 [shape = 's32[2]{0}', space=sflag, size = 0x8, scoped, tag = 'scoped memory for tpu_custom_call.1']
    #allocation9 [shape = 'u8[65536]{0}', space=vmem, size = 0x10000, scoped, tag = 'input window, operand 3']
    #allocation10 [shape = 's32[2]{0}', space=sflag, size = 0x8, scoped, tag = 'scoped memory for tpu_custom_call.1']
    #allocation11 [shape = 'u8[8192]{0}', space=vmem, size = 0x2000, scoped, tag = 'output window, operand 0']
    %21 = vsyncpa [#allocation7], 0
    %s22 = scalar_lea.sflag [#allocation7], 1
    %23 = vsyncpa %s22, 0
    %24 = vsyncpa [#allocation10], 0
    %s25 = scalar_lea.sflag [#allocation10], 1
    %26 = vsyncpa %s25, 0
    %27 = vsyncpa [#allocation8], 0
    %s28 = scalar_lea.sflag [#allocation8], 1
    %29 = vsyncpa %s28, 0
    loop: start=0, step=1, limit=6
    $region2: #{tpu_custom_call.1} parent=1 // loop_pre_header
      _
    $region3: #{tpu_custom_call.1} parent=1 // loop_header
      %s31 = sphi 0, %s35
      %p32 = scmp.ge.s32.totalorder %s31, 6
      %s38 = sphi 0, %s50
      %s39 = sphi 0, %s46
      %s40 = sphi 0, %s38
      %s41 = sphi 0, %s39
      %s42 = sphi 0, %s40
      %s43 = sphi 0, %s41
      %s69 = sphi 0, %s71
      %s72 = sphi 0, %s69
      %s73 = sphi 0, %s72
      %s89 = sphi 0, %s73
      %s107 = sphi 0, %s109
      %s110 = sphi 0, %s107
      %s111 = sphi 0, %s110
      %s127 = sphi 0, %s111
      %s131 = sphi 0, %s131
      %s133 = sphi 0, %s131
      %s134 = sphi 0, %s133
      %s148 = sphi 0, %s134
      %s154 = sphi 0, %s156
      %s157 = sphi 0, %s154
      %s158 = sphi 0, %s157
      %s174 = sphi 0, %s158
      %s180 = sphi 0, %s182
      %s183 = sphi 0, %s180
      %s184 = sphi 0, %s183
      %s200 = sphi 0, %s184
    $region4: #{tpu_custom_call.1} parent=1 // loop_header_branch
      %34 = sbr.rel (%p32) target = $region8
    $region5: #{tpu_custom_call.1} parent=1 // loop_body
      %s36 = ssub.s32 %s31, 1
      %s37 = ssub.s32 %s31, 2
      %s44 = sadd.s32 1, %s39
      %p45 = scmp.ge.s32.totalorder %s44, 2
      %s46 = scalar_select %p45, 0, %s44
      %s47 = sadd.s32 1, %s38
      %s48 = scalar_select %p45, %s47, %s38
      %p49 = scmp.ge.s32.totalorder %s48, 2
      %s50 = scalar_select %p49, 0, %s48
      %s51 = sld [smem:[#allocation5 + %s38]]
      %s52 = sld [smem:[#allocation4 + %s38]]
      %p53 = scmp.gt.s32.totalorder %s52, 0
      %s54 = scalar_select %p53, 1, 0
      %s55 = smul.u32 %s54, %s39
      %s56 = ssub.s32 1, %s54
      %s57 = sadd.s32 %s55, %s56
      %s58 = sld [smem:[#allocation5 + %s50]]
      %s59 = sld [smem:[#allocation4 + %s50]]
      %p60 = scmp.gt.s32.totalorder %s59, 0
      %s61 = scalar_select %p60, 1, 0
      %s62 = smul.u32 %s61, %s46
      %s63 = ssub.s32 1, %s61
      %s64 = sadd.s32 %s62, %s63
      %s65 = ssub.s32 %s51, %s58
      %s66 = ssub.s32 %s57, %s64
      %s67 = sor.u32 %s65, %s66
      %p68 = scmp.eq.s32.totalorder %s67, 0
      %s70 = sadd.s32 %s69, 1
      %s71 = scalar_select %p68, %s69, %s70
      %p74 = pneg %p68
      %p75 = scmp.eq.s32.totalorder %s31, 3
      %p76 = por %p74, %p75
      %p77 = scmp.ne.s32.totalorder %s69, %s72
      %p78 = scmp.eq.s32.totalorder %s31, 0
      %p79 = por %p77, %p78
      %p80 = scmp.ne.s32.totalorder %s69, %s72
      %p81 = scmp.eq.s32.totalorder %s36, 3
      %p82 = por %p80, %p81
      %p83 = scmp.ne.s32.totalorder %s72, %s73
      %p84 = scmp.eq.s32.totalorder %s36, 0
      %p85 = por %p83, %p84
      %p86 = scmp.ne.s32.totalorder %s72, %s73
      %p87 = scmp.eq.s32.totalorder %s37, 3
      %p88 = por %p86, %p87
      %p90 = scmp.ne.s32.totalorder %s73, %s89
      %p91 = scmp.eq.s32.totalorder %s37, 0
      %p92 = por %p90, %p91
      %s93 = sld [smem:[#allocation4 + %s38]]
      %p94 = scmp.gt.s32.totalorder %s93, 0
      %s95 = scalar_select %p94, 1, 0
      %s96 = smul.u32 %s95, %s39
      %s97 = ssub.s32 1, %s95
      %s98 = sadd.s32 %s96, %s97
      %s99 = sld [smem:[#allocation4 + %s50]]
      %p100 = scmp.gt.s32.totalorder %s99, 0
      %s101 = scalar_select %p100, 1, 0
      %s102 = smul.u32 %s101, %s46
      %s103 = ssub.s32 1, %s101
      %s104 = sadd.s32 %s102, %s103
      %s105 = ssub.s32 %s98, %s104
      %p106 = scmp.eq.s32.totalorder %s105, 0
      %s108 = sadd.s32 %s107, 1
      %s109 = scalar_select %p106, %s107, %s108
      %p112 = pneg %p106
      %p113 = scmp.eq.s32.totalorder %s31, 3
      %p114 = por %p112, %p113
      %p115 = scmp.ne.s32.totalorder %s107, %s110
      %p116 = scmp.eq.s32.totalorder %s31, 0
      %p117 = por %p115, %p116
      %p118 = scmp.ne.s32.totalorder %s107, %s110
      %p119 = scmp.eq.s32.totalorder %s36, 3
      %p120 = por %p118, %p119
      %p121 = scmp.ne.s32.totalorder %s110, %s111
      %p122 = scmp.eq.s32.totalorder %s36, 0
      %p123 = por %p121, %p122
      %p124 = scmp.ne.s32.totalorder %s110, %s111
      %p125 = scmp.eq.s32.totalorder %s37, 3
      %p126 = por %p124, %p125
      %p128 = scmp.ne.s32.totalorder %s111, %s127
      %p129 = scmp.eq.s32.totalorder %s37, 0
      %p130 = por %p128, %p129
      %s132 = sadd.s32 %s131, 1
      %p135 = scmp.eq.s32.totalorder %s31, 3
      %p136 = scmp.ne.s32.totalorder %s131, %s133
      %p137 = scmp.eq.s32.totalorder %s31, 0
      %p138 = por %p136, %p137
      %p139 = scmp.ne.s32.totalorder %s131, %s133
      %p140 = scmp.eq.s32.totalorder %s36, 3
      %p141 = por %p139, %p140
      %p142 = scmp.ne.s32.totalorder %s133, %s134
      %p143 = scmp.eq.s32.totalorder %s36, 0
      %p144 = por %p142, %p143
      %p145 = scmp.ne.s32.totalorder %s133, %s134
      %p146 = scmp.eq.s32.totalorder %s37, 3
      %p147 = por %p145, %p146
      %p149 = scmp.ne.s32.totalorder %s134, %s148
      %p150 = scmp.eq.s32.totalorder %s37, 0
      %p151 = por %p149, %p150
      %s152 = ssub.s32 %s38, %s50
      %p153 = scmp.eq.s32.totalorder %s152, 0
      %s155 = sadd.s32 %s154, 1
      %s156 = scalar_select %p153, %s154, %s155
      %p159 = pneg %p153
      %p160 = scmp.eq.s32.totalorder %s31, 3
      %p161 = por %p159, %p160
      %p162 = scmp.ne.s32.totalorder %s154, %s157
      %p163 = scmp.eq.s32.totalorder %s31, 0
      %p164 = por %p162, %p163
      %p165 = scmp.ne.s32.totalorder %s154, %s157
      %p166 = scmp.eq.s32.totalorder %s36, 3
      %p167 = por %p165, %p166
      %p168 = scmp.ne.s32.totalorder %s157, %s158
      %p169 = scmp.eq.s32.totalorder %s36, 0
      %p170 = por %p168, %p169
      %p171 = scmp.ne.s32.totalorder %s157, %s158
      %p172 = scmp.eq.s32.totalorder %s37, 3
      %p173 = por %p171, %p172
      %p175 = scmp.ne.s32.totalorder %s158, %s174
      %p176 = scmp.eq.s32.totalorder %s37, 0
      %p177 = por %p175, %p176
      %s178 = ssub.s32 %s38, %s50
      %p179 = scmp.eq.s32.totalorder %s178, 0
      %s181 = sadd.s32 %s180, 1
      %s182 = scalar_select %p179, %s180, %s181
      %p185 = pneg %p179
      %p186 = scmp.eq.s32.totalorder %s31, 3
      %p187 = por %p185, %p186
      %p188 = scmp.ne.s32.totalorder %s180, %s183
      %p189 = scmp.eq.s32.totalorder %s31, 0
      %p190 = por %p188, %p189
      %p191 = scmp.ne.s32.totalorder %s180, %s183
      %p192 = scmp.eq.s32.totalorder %s36, 3
      %p193 = por %p191, %p192
      %p194 = scmp.ne.s32.totalorder %s183, %s184
      %p195 = scmp.eq.s32.totalorder %s36, 0
      %p196 = por %p194, %p195
      %p197 = scmp.ne.s32.totalorder %s183, %s184
      %p198 = scmp.eq.s32.totalorder %s37, 3
      %p199 = por %p197, %p198
      %p201 = scmp.ne.s32.totalorder %s184, %s200
      %p202 = scmp.eq.s32.totalorder %s37, 0
      %p203 = por %p201, %p202
      %p204 = scmp.le.s32.totalorder 1, %s31
      %p205 = scmp.lt.s32.totalorder %s31, 5
      %p206 = pnand %p204, %p205
      %p207 = pneg %p206
      // Predicated region
      $region9: #{tpu_custom_call.1} parent=5 // pred_check
        _
      $region10: #{tpu_custom_call.1} parent=5 // pred_check_branch
        %209 = sbr.rel (%p206) target = $region12
      $region11: #{tpu_custom_call.1} parent=5 // pred_region
        %s210 = ssub.s32 %s31, 1
        // Predicated region
        $region13: #{tpu_custom_call.1} parent=11 // pred_check
          %p211 = pneg %p144
        $region14: #{tpu_custom_call.1} parent=11 // pred_check_branch
          %213 = sbr.rel (%p211) target = $region16
        $region15: #{tpu_custom_call.1} parent=11 // pred_region
          _
        $region16: #{tpu_custom_call.1} parent=11 // pred_fallthru
          _
      $region12: #{tpu_custom_call.1} parent=5 // pred_fallthru
        _
      %p214 = scmp.lt.s32.totalorder %s31, 4
      // Predicated region
      $region17: #{tpu_custom_call.1} parent=5 // pred_check
        %p215 = pneg %p214
      $region18: #{tpu_custom_call.1} parent=5 // pred_check_branch
        %217 = sbr.rel (%p215) target = $region20
      $region19: #{tpu_custom_call.1} parent=5 // pred_region
        // Predicated region
        $region21: #{tpu_custom_call.1} parent=19 // pred_check
          %p218 = pneg %p79
        $region22: #{tpu_custom_call.1} parent=19 // pred_check_branch
          %220 = sbr.rel (%p218) target = $region24
        $region23: #{tpu_custom_call.1} parent=19 // pred_region
          %s221 = sand.u32 %s69, 1
          %s222 = scalar_lea.sflag [#allocation7], %s221
          %s223 = sand.u32 %s69, 1
          %s224 = smul.addr %s223, 32
          %s225 = scalar_lea.vmem [#allocation6], %s224
          %s226 = sld [smem:[#allocation5 + %s38]]
          %s227 = sld [smem:[#allocation4 + %s38]]
          %p228 = scmp.gt.s32.totalorder %s227, 0
          %s229 = scalar_select %p228, 1, 0
          %s230 = smul.u32 %s229, %s39
          %s231 = ssub.s32 1, %s229
          %s232 = sadd.s32 %s230, %s231
          %s233 = smul.u32 8, %s226
          %s235 = ssub.s32 512, 512
          %236 = vsyncadd %s222, %s235
          %s237 = smul.addr %s233, 2
          %s238 = sadd.s32 %s232, %s237
          %s239 = smul.addr %s238, 64
          %s240 = scalar_lea.hbm %s2, %s239
          %s241 = sshll.u32 %s225, 4
          %s242 = int_to_ptr.vmem [resolvable:$true] %s241
          %247 = dma.hbm_to_vmem [thread:$0]  %s240, 512, %s242, %s222, 128, 64, 4
        $region24: #{tpu_custom_call.1} parent=19 // pred_fallthru
          _
        // Predicated region
        $region25: #{tpu_custom_call.1} parent=19 // pred_check
          %p248 = pneg %p117
        $region26: #{tpu_custom_call.1} parent=19 // pred_check_branch
          %250 = sbr.rel (%p248) target = $region28
        $region27: #{tpu_custom_call.1} parent=19 // pred_region
          %s251 = sand.u32 %s107, 1
          %s252 = scalar_lea.sflag [#allocation10], %s251
          %s253 = sand.u32 %s107, 1
          %s254 = smul.addr %s253, 64
          %s255 = scalar_lea.vmem [#allocation9], %s254
          %s256 = sld [smem:[#allocation4 + %s38]]
          %p257 = scmp.gt.s32.totalorder %s256, 0
          %s258 = scalar_select %p257, 1, 0
          %s259 = smul.u32 %s258, %s39
          %s260 = ssub.s32 1, %s258
          %s261 = sadd.s32 %s259, %s260
          %s262 = smul.u32 16, %s261
          %s264 = ssub.s32 1024, 1024
          %265 = vsyncadd %s252, %s264
          %s266 = smul.addr %s262, 64
          %s267 = scalar_lea.hbm %s3, %s266
          %s268 = sshll.u32 %s255, 4
          %s269 = int_to_ptr.vmem [resolvable:$true] %s268
          %274 = dma.hbm_to_vmem [thread:$0]  %s267, 1024, %s269, %s252, 64, 64, 4
        $region28: #{tpu_custom_call.1} parent=19 // pred_fallthru
          _
        // Predicated region
        $region29: #{tpu_custom_call.1} parent=19 // pred_check
          %p275 = pneg %p164
        $region30: #{tpu_custom_call.1} parent=19 // pred_check_branch
          %277 = sbr.rel (%p275) target = $region32
        $region31: #{tpu_custom_call.1} parent=19 // pred_region
          %p278 = scmp.lt.s32.totalorder %s38, 1
          %s279 = scalar_select %p278, %s38, 1
          %s280 = smul.addr %s279, 8
          %s281 = scalar_lea.vmem %s5, %s280
        $region32: #{tpu_custom_call.1} parent=19 // pred_fallthru
          _
      $region20: #{tpu_custom_call.1} parent=5 // pred_fallthru
        _
      %p282 = scmp.le.s32.totalorder 1, %s31
      %p283 = scmp.lt.s32.totalorder %s31, 5
      %p284 = pnand %p282, %p283
      %p285 = pneg %p284
      // Predicated region
      $region33: #{tpu_custom_call.1} parent=5 // pred_check
        _
      $region34: #{tpu_custom_call.1} parent=5 // pred_check_branch
        %287 = sbr.rel (%p284) target = $region36
      $region35: #{tpu_custom_call.1} parent=5 // pred_region
        %s288 = ssub.s32 %s31, 1
        %s289 = sand.u32 %s72, 1
        %s290 = scalar_lea.sflag [#allocation7], %s289
        %s291 = sand.u32 %s72, 1
        %s292 = smul.addr %s291, 32
        %s293 = scalar_lea.vmem [#allocation6], %s292
        // Predicated region
        $region37: #{tpu_custom_call.1} parent=35 // pred_check
          %p294 = pneg %p85
        $region38: #{tpu_custom_call.1} parent=35 // pred_check_branch
          %296 = sbr.rel (%p294) target = $region40
        $region39: #{tpu_custom_call.1} parent=35 // pred_region
          %297 = dma.done %s290, 512
        $region40: #{tpu_custom_call.1} parent=35 // pred_fallthru
          _
        %s298 = sand.u32 %s110, 1
        %s299 = scalar_lea.sflag [#allocation10], %s298
        %s300 = sand.u32 %s110, 1
        %s301 = smul.addr %s300, 64
        %s302 = scalar_lea.vmem [#allocation9], %s301
        // Predicated region
        $region41: #{tpu_custom_call.1} parent=35 // pred_check
          %p303 = pneg %p123
        $region42: #{tpu_custom_call.1} parent=35 // pred_check_branch
          %305 = sbr.rel (%p303) target = $region44
        $region43: #{tpu_custom_call.1} parent=35 // pred_region
          %306 = dma.done %s299, 1024
        $region44: #{tpu_custom_call.1} parent=35 // pred_fallthru
          _
        %s307 = sand.u32 %s72, 1
        %s308 = scalar_lea.sflag [#allocation7], %s307
        %s309 = sand.u32 %s72, 1
        %s310 = smul.addr %s309, 32
        %s311 = scalar_lea.vmem [#allocation6], %s310
        %p312 = pneg %p85
        %p313 = pneg %p82
        %s314 = sand.u32 %s110, 1
        %s315 = scalar_lea.sflag [#allocation10], %s314
        %s316 = sand.u32 %s110, 1
        %s317 = smul.addr %s316, 64
        %s318 = scalar_lea.vmem [#allocation9], %s317
        %p319 = pneg %p123
        %p320 = pneg %p120
        %p321 = pneg %p144
        %p322 = pneg %p141
        %p323 = scmp.lt.s32.totalorder %s40, 1
        %s324 = scalar_select %p323, %s40, 1
        %s325 = smul.addr %s324, 8
        %s326 = scalar_lea.vmem %s5, %s325
        %p327 = pneg %p170
        %p328 = pneg %p167
        %p329 = pneg %p196
        %p330 = pneg %p193
        %s331 = sand.u32 %s183, 1
        %s332 = scalar_lea.sflag [#allocation8], %s331
        %s333 = sand.u32 %s183, 1
        %s334 = smul.addr %s333, 8
        %s335 = scalar_lea.vmem [#allocation11], %s334
        %s336 = sld [smem:[#allocation5 + %s40]]
        %s337 = sld [smem:[#allocation4 + %s40]]
        %p338 = scmp.gt.s32.totalorder %s337, 0
        %s339 = scalar_select %p338, 1, 0
        %s340 = smul.u32 %s339, %s41
        %s341 = ssub.s32 1, %s339
        %s342 = sadd.s32 %s340, %s341
        %s343 = smul.u32 8, %s336
        %s344 = sld [smem:[#allocation4 + %s40]]
        %p345 = scmp.gt.s32.totalorder %s344, 0
        %s346 = scalar_select %p345, 1, 0
        %s347 = smul.u32 %s346, %s41
        %s348 = ssub.s32 1, %s346
        %s349 = sadd.s32 %s347, %s348
        %s350 = smul.u32 16, %s349
        %p351 = scmp.lt.s32.totalorder %s40, 1
        %s352 = scalar_select %p351, %s40, 1
        %s353 = smul.addr %s352, 8
        %s354 = scalar_lea.vmem %s5, %s353
        %p356 = scmp.eq.s32.totalorder %s41, 0
        // Predicated region
        $region45: #{tpu_custom_call.1} parent=35 // pred_check
          %p357 = pneg %p356
        $region46: #{tpu_custom_call.1} parent=35 // pred_check_branch
          %359 = sbr.rel (%p357) target = $region48
        $region47: #{tpu_custom_call.1} parent=35 // pred_region
          %360 = vst [vmem:[#allocation2] sm:$0xff] 0.0
        $region48: #{tpu_custom_call.1} parent=35 // pred_fallthru
          _
        %s361 = sld [smem:[#allocation4 + %s40]]
        %p362 = scmp.gt.s32.totalorder %s361, 0
        // Predicated region
        $region49: #{tpu_custom_call.1} parent=35 // pred_check
          %p363 = pneg %p362
        $region50: #{tpu_custom_call.1} parent=35 // pred_check_branch
          %365 = sbr.rel (%p363) target = $region52
        $region51: #{tpu_custom_call.1} parent=35 // pred_region
          %v366 = vld [vmem:[%s293] sm:$0xf]
          %v367 = vld [vmem:[%s293 + $0x4] sm:$0xf]
          %v368 = vld [vmem:[%s293 + $0x8] sm:$0xf]
          %v369 = vld [vmem:[%s293 + $0xc] sm:$0xf]
          %v370 = vld [vmem:[%s293 + $0x10] sm:$0xf]
          %v371 = vld [vmem:[%s293 + $0x14] sm:$0xf]
          %v372 = vld [vmem:[%s293 + $0x18] sm:$0xf]
          %v373 = vld [vmem:[%s293 + $0x1c] sm:$0xf]
          %vm374 = vcmask 1043456
          %v375 = vsel %vm374, %v366, -inf
          %v376 = vrot.slane %v375, 4
          %v377 = vmax.f32 %v375, %v376
          %v378 = vrot.slane %v377, 2
          %v379 = vmax.f32 %v377, %v378
          %v380 = vrot.slane %v379, 1
          %v381 = vmax.f32 %v379, %v380
          %v382 = vsel %vm374, %v367, -inf
          %v383 = vrot.slane %v382, 4
          %v384 = vmax.f32 %v382, %v383
          %v385 = vrot.slane %v384, 2
          %v386 = vmax.f32 %v384, %v385
          %v387 = vrot.slane %v386, 1
          %v388 = vmax.f32 %v386, %v387
          %v389 = vsel %vm374, %v368, -inf
          %v390 = vrot.slane %v389, 4
          %v391 = vmax.f32 %v389, %v390
          %v392 = vrot.slane %v391, 2
          %v393 = vmax.f32 %v391, %v392
          %v394 = vrot.slane %v393, 1
          %v395 = vmax.f32 %v393, %v394
          %v396 = vsel %vm374, %v369, -inf
          %v397 = vrot.slane %v396, 4
          %v398 = vmax.f32 %v396, %v397
          %v399 = vrot.slane %v398, 2
          %v400 = vmax.f32 %v398, %v399
          %v401 = vrot.slane %v400, 1
          %v402 = vmax.f32 %v400, %v401
          %v403 = vsel %vm374, %v370, -inf
          %v404 = vrot.slane %v403, 4
          %v405 = vmax.f32 %v403, %v404
          %v406 = vrot.slane %v405, 2
          %v407 = vmax.f32 %v405, %v406
          %v408 = vrot.slane %v407, 1
          %v409 = vmax.f32 %v407, %v408
          %v410 = vsel %vm374, %v371, -inf
          %v411 = vrot.slane %v410, 4
          %v412 = vmax.f32 %v410, %v411
          %v413 = vrot.slane %v412, 2
          %v414 = vmax.f32 %v412, %v413
          %v415 = vrot.slane %v414, 1
          %v416 = vmax.f32 %v414, %v415
          %v417 = vsel %vm374, %v372, -inf
          %v418 = vrot.slane %v417, 4
          %v419 = vmax.f32 %v417, %v418
          %v420 = vrot.slane %v419, 2
          %v421 = vmax.f32 %v419, %v420
          %v422 = vrot.slane %v421, 1
          %v423 = vmax.f32 %v421, %v422
          %v424 = vsel %vm374, %v373, -inf
          %v425 = vrot.slane %v424, 4
          %v426 = vmax.f32 %v424, %v425
          %v427 = vrot.slane %v426, 2
          %v428 = vmax.f32 %v426, %v427
          %v429 = vrot.slane %v428, 1
          %v430 = vmax.f32 %v428, %v429
          %v431 = vsel %vm374, %v366, inf
          %v432 = vrot.slane %v431, 4
          %v433 = vmin.f32 %v431, %v432
          %v434 = vrot.slane %v433, 2
          %v435 = vmin.f32 %v433, %v434
          %v436 = vrot.slane %v435, 1
          %v437 = vmin.f32 %v435, %v436
          %v438 = vsel %vm374, %v367, inf
          %v439 = vrot.slane %v438, 4
          %v440 = vmin.f32 %v438, %v439
          %v441 = vrot.slane %v440, 2
          %v442 = vmin.f32 %v440, %v441
          %v443 = vrot.slane %v442, 1
          %v444 = vmin.f32 %v442, %v443
          %v445 = vsel %vm374, %v368, inf
          %v446 = vrot.slane %v445, 4
          %v447 = vmin.f32 %v445, %v446
          %v448 = vrot.slane %v447, 2
          %v449 = vmin.f32 %v447, %v448
          %v450 = vrot.slane %v449, 1
          %v451 = vmin.f32 %v449, %v450
          %v452 = vsel %vm374, %v369, inf
          %v453 = vrot.slane %v452, 4
          %v454 = vmin.f32 %v452, %v453
          %v455 = vrot.slane %v454, 2
          %v456 = vmin.f32 %v454, %v455
          %v457 = vrot.slane %v456, 1
          %v458 = vmin.f32 %v456, %v457
          %v459 = vsel %vm374, %v370, inf
          %v460 = vrot.slane %v459, 4
          %v461 = vmin.f32 %v459, %v460
          %v462 = vrot.slane %v461, 2
          %v463 = vmin.f32 %v461, %v462
          %v464 = vrot.slane %v463, 1
          %v465 = vmin.f32 %v463, %v464
          %v466 = vsel %vm374, %v371, inf
          %v467 = vrot.slane %v466, 4
          %v468 = vmin.f32 %v466, %v467
          %v469 = vrot.slane %v468, 2
          %v470 = vmin.f32 %v468, %v469
          %v471 = vrot.slane %v470, 1
          %v472 = vmin.f32 %v470, %v471
          %v473 = vsel %vm374, %v372, inf
          %v474 = vrot.slane %v473, 4
          %v475 = vmin.f32 %v473, %v474
          %v476 = vrot.slane %v475, 2
          %v477 = vmin.f32 %v475, %v476
          %v478 = vrot.slane %v477, 1
          %v479 = vmin.f32 %v477, %v478
          %v480 = vsel %vm374, %v373, inf
          %v481 = vrot.slane %v480, 4
          %v482 = vmin.f32 %v480, %v481
          %v483 = vrot.slane %v482, 2
          %v484 = vmin.f32 %v482, %v483
          %v485 = vrot.slane %v484, 1
          %v486 = vmin.f32 %v484, %v485
          %v487 = vsub.f32 0.0, %v437
          %v488 = vsub.f32 0.0, %v444
          %v489 = vsub.f32 0.0, %v451
          %v490 = vsub.f32 0.0, %v458
          %v491 = vsub.f32 0.0, %v465
          %v492 = vsub.f32 0.0, %v472
          %v493 = vsub.f32 0.0, %v479
          %v494 = vsub.f32 0.0, %v486
          %vm495 = vcmp.ge.f32.partialorder %v381, %v487
          %vm496 = vcmp.ge.f32.partialorder %v388, %v488
          %vm497 = vcmp.ge.f32.partialorder %v395, %v489
          %vm498 = vcmp.ge.f32.partialorder %v402, %v490
          %vm499 = vcmp.ge.f32.partialorder %v409, %v491
          %vm500 = vcmp.ge.f32.partialorder %v416, %v492
          %vm501 = vcmp.ge.f32.partialorder %v423, %v493
          %vm502 = vcmp.ge.f32.partialorder %v430, %v494
          %v503 = vsel %vm495, %v381, %v437
          %v504 = vsel %vm496, %v388, %v444
          %v505 = vsel %vm497, %v395, %v451
          %v506 = vsel %vm498, %v402, %v458
          %v507 = vsel %vm499, %v409, %v465
          %v508 = vsel %vm500, %v416, %v472
          %v509 = vsel %vm501, %v423, %v479
          %v510 = vsel %vm502, %v430, %v486
          %v511 = vld [vmem:[#allocation2] sm:$0xff]
          %v512 = vpack.c.bf16 %v503, %v503
          %v513 = vpack.c.bf16 %v504, %v504
          %v514 = vpack.c.bf16 %v505, %v505
          %v515 = vpack.c.bf16 %v506, %v506
          %v516 = vpack.c.bf16 %v507, %v507
          %v517 = vpack.c.bf16 %v508, %v508
          %v518 = vpack.c.bf16 %v509, %v509
          %v519 = vpack.c.bf16 %v510, %v510
          %v520 = vld [vmem:[%s302] sm:$0xf]
          %v521 = vld [vmem:[%s302 + $0x4] sm:$0xf]
          %v522 = vld [vmem:[%s302 + $0x8] sm:$0xf]
          %v523 = vld [vmem:[%s302 + $0xc] sm:$0xf]
          %v524 = vld [vmem:[%s302 + $0x10] sm:$0xf]
          %v525 = vld [vmem:[%s302 + $0x14] sm:$0xf]
          %v526 = vld [vmem:[%s302 + $0x18] sm:$0xf]
          %v527 = vld [vmem:[%s302 + $0x1c] sm:$0xf]
          %v528 = vld [vmem:[%s302 + $0x20] sm:$0xf]
          %v529 = vld [vmem:[%s302 + $0x24] sm:$0xf]
          %v530 = vld [vmem:[%s302 + $0x28] sm:$0xf]
          %v531 = vld [vmem:[%s302 + $0x2c] sm:$0xf]
          %v532 = vld [vmem:[%s302 + $0x30] sm:$0xf]
          %v533 = vld [vmem:[%s302 + $0x34] sm:$0xf]
          %v534 = vld [vmem:[%s302 + $0x38] sm:$0xf]
          %v535 = vld [vmem:[%s302 + $0x3c] sm:$0xf]
          %v544 = vunpack.c.l.b16 %v512
          %v545 = vunpack.c.l.b16 %v513
          %v546 = vunpack.c.l.b16 %v514
          %v547 = vunpack.c.l.b16 %v515
          %v548 = vunpack.c.l.b16 %v516
          %v549 = vunpack.c.l.b16 %v517
          %v550 = vunpack.c.l.b16 %v518
          %v551 = vunpack.c.l.b16 %v519
          %vm552 = vcmask 1041409
          %v553 = vsel %vm552, %v545, %v544
          %vm554 = vcmask 1042434
          %v555 = vsel %vm554, %v546, %v553
          %vm556 = vcmask 1043459
          %v557 = vsel %vm556, %v547, %v555
          %vm558 = vcmask 1044484
          %v559 = vsel %vm558, %v548, %v557
          %vm560 = vcmask 1045509
          %v561 = vsel %vm560, %v549, %v559
          %vm562 = vcmask 1046534
          %v563 = vsel %vm562, %v550, %v561
          %vm564 = vcmask 1047559
          %v565 = vsel %vm564, %v551, %v563
          %v566 = vpack.c.b16 %v565, %v565
          %v584 = vunpack.c.l.b16 %v520
          %v585 = vunpack.c.l.b16 %v521
          %v586 = vunpack.c.l.b16 %v522
          %v587 = vunpack.c.l.b16 %v523
          %v588 = vunpack.c.l.b16 %v524
          %v589 = vunpack.c.l.b16 %v525
          %v590 = vunpack.c.l.b16 %v526
          %v591 = vunpack.c.l.b16 %v527
          %v592 = vunpack.c.l.b16 %v528
          %v593 = vunpack.c.l.b16 %v529
          %v594 = vunpack.c.l.b16 %v530
          %v595 = vunpack.c.l.b16 %v531
          %v596 = vunpack.c.l.b16 %v532
          %v597 = vunpack.c.l.b16 %v533
          %v598 = vunpack.c.l.b16 %v534
          %v599 = vunpack.c.l.b16 %v535
          %v600 = vpack.c.b16 %v585, %v584
          %v601 = vpack.c.b16 %v587, %v586
          %v602 = vpack.c.b16 %v589, %v588
          %v603 = vpack.c.b16 %v591, %v590
          %v604 = vpack.c.b16 %v593, %v592
          %v605 = vpack.c.b16 %v595, %v594
          %v606 = vpack.c.b16 %v597, %v596
          %v607 = vpack.c.b16 %v599, %v598
          %616 = vmatprep.subr.bf16.mxu0 0
          %617 = vmatpush1.bf16.msra.mxu0 %v600
          %618 = vmatprep.subr.bf16.mxu0 0
          %619 = vmatpush1.bf16.msra.mxu0 %v601
          %620 = vmatprep.subr.bf16.mxu0 0
          %621 = vmatpush1.bf16.msra.mxu0 %v602
          %622 = vmatprep.subr.bf16.mxu0 0
          %623 = vmatpush1.bf16.msra.mxu0 %v603
          %624 = vmatprep.subr.bf16.mxu0 0
          %625 = vmatpush1.bf16.msra.mxu0 %v604
          %626 = vmatprep.subr.bf16.mxu0 0
          %627 = vmatpush1.bf16.msra.mxu0 %v605
          %628 = vmatprep.subr.bf16.mxu0 0
          %629 = vmatpush1.bf16.msra.mxu0 %v606
          %630 = vmatprep.subr.bf16.mxu0 0
          %631 = vmatpush1.bf16.msra.mxu0 %v607
          %632 = vmatprep.subr.bf16.mxu0 0
          %633 = vmatpush1.bf16.msra.mxu0 0
          %634 = vmatprep.subr.bf16.mxu0 0
          %635 = vmatpush1.bf16.msra.mxu0 0
          %636 = vmatprep.subr.bf16.mxu0 0
          %637 = vmatpush1.bf16.msra.mxu0 0
          %638 = vmatprep.subr.bf16.mxu0 0
          %639 = vmatpush1.bf16.msra.mxu0 0
          %640 = vmatprep.subr.bf16.mxu0 0
          %641 = vmatpush1.bf16.msra.mxu0 0
          %642 = vmatprep.subr.bf16.mxu0 0
          %643 = vmatpush1.bf16.msra.mxu0 0
          %644 = vmatprep.subr.bf16.mxu0 0
          %645 = vmatpush1.bf16.msra.mxu0 0
          %646 = vmatprep.subr.bf16.mxu0 0
          %647 = vmatpush1.bf16.msra.mxu0 0
          %648 = vmatprep.mubr.bf16.mxu0 0
          %649 = vmatmul.mubr.bf16.gmra.mrb[0].mxu0 %v566
          %v650 = vpop.f32.mrb[0].mxu0
          %v651 = vadd.f32 0.0, %v650
          %v652 = vpop.f32.mrb[0].mxu0
          %v653 = vpop.f32.mrb[0].mxu0
          %v654 = vpop.f32.mrb[0].mxu0
          %655 = vdwg.mxu0
          %v656 = vadd.f32 %v511, %v651
          %657 = vst [vmem:[#allocation2] sm:$0xff] %v656
        $region52: #{tpu_custom_call.1} parent=35 // pred_fallthru
          _
        %p658 = scmp.eq.s32.totalorder %s41, 1
        // Predicated region
        $region53: #{tpu_custom_call.1} parent=35 // pred_check
          %p659 = pneg %p658
        $region54: #{tpu_custom_call.1} parent=35 // pred_check_branch
          %661 = sbr.rel (%p659) target = $region56
        $region55: #{tpu_custom_call.1} parent=35 // pred_region
          %v662 = vld [vmem:[#allocation2] sm:$0xff]
          %v663 = vld [vmem:[%s4] sm:$0x1]
          %v665 = vlaneseq
          %v666 = vshrl.u32 %v665, 7
          %v667 = vsub.s32 0, %v666
          %v668 = vrot.slane %v663, %v667
          %v670 = vadd.f32 %v662, %v668
          %v671 = vld [vmem:[%s354] sm:$0xff]
          %vm672 = vcmp.gt.f32.partialorder %v671, 0.0
          %v673 = vsel %vm672, 1, 0
          %674 = vset.pattern.permute.xlu0 0
          %675 = vperm.xlu0 %674, %v673
          %v676 = vpop.permute.xlu0 %675
          %vm677 = vcmp.eq.s32.totalorder %v676, 1
          %v678 = vsel %vm677, %v670, 0.0
          %679 = vst [vmem:[%s335] sm:$0xff] %v678
        $region56: #{tpu_custom_call.1} parent=35 // pred_fallthru
          _
        %s680 = sand.u32 %s183, 1
        %s681 = scalar_lea.sflag [#allocation8], %s680
        %s682 = sand.u32 %s183, 1
        %s683 = smul.addr %s682, 8
        %s684 = scalar_lea.vmem [#allocation11], %s683
        // Predicated region
        $region57: #{tpu_custom_call.1} parent=35 // pred_check
          %p685 = pneg %p193
        $region58: #{tpu_custom_call.1} parent=35 // pred_check_branch
          %687 = sbr.rel (%p685) target = $region60
        $region59: #{tpu_custom_call.1} parent=35 // pred_region
          %s689 = ssub.s32 128, 128
          %690 = vsyncadd %s681, %s689
          %s691 = smul.addr %s40, 128
          %s692 = scalar_lea.hbm %s6, %s691
          %s694 = sshll.u32 %s684, 4
          %s695 = int_to_ptr.vmem [resolvable:$true] %s694
          %697 = dma.vmem_to_hbm [thread:$0]  %s695, 128, %s692, %s681
        $region60: #{tpu_custom_call.1} parent=35 // pred_fallthru
          _
      $region36: #{tpu_custom_call.1} parent=5 // pred_fallthru
        _
      %p698 = scmp.le.s32.totalorder 2, %s31
      // Predicated region
      $region61: #{tpu_custom_call.1} parent=5 // pred_check
        %p699 = pneg %p698
      $region62: #{tpu_custom_call.1} parent=5 // pred_check_branch
        %701 = sbr.rel (%p699) target = $region64
      $region63: #{tpu_custom_call.1} parent=5 // pred_region
        %s702 = ssub.s32 %s31, 2
        // Predicated region
        $region65: #{tpu_custom_call.1} parent=63 // pred_check
          %p703 = pneg %p199
        $region66: #{tpu_custom_call.1} parent=63 // pred_check_branch
          %705 = sbr.rel (%p703) target = $region68
        $region67: #{tpu_custom_call.1} parent=63 // pred_region
          %s706 = sand.u32 %s184, 1
          %s707 = scalar_lea.sflag [#allocation8], %s706
          %s708 = sand.u32 %s184, 1
          %s709 = smul.addr %s708, 8
          %s710 = scalar_lea.vmem [#allocation11], %s709
          %711 = dma.done %s707, 128
        $region68: #{tpu_custom_call.1} parent=63 // pred_fallthru
          _
      $region64: #{tpu_custom_call.1} parent=5 // pred_fallthru
        _
    $region6: #{tpu_custom_call.1} parent=1 // loop_footer
      %s35 = sadd.s32 1, %s31
    $region7: #{tpu_custom_call.1} parent=1 // loop_footer_branch
      %30 = sbr.rel target = $region3
    $region8: #{tpu_custom_call.1} parent=1 // loop_exit
      _
    %712 = vsyncpa [#allocation7], 1
    %s713 = scalar_lea.sflag [#allocation7], 1
    %714 = vsyncpa %s713, 1
    %715 = vsyncpa [#allocation10], 1
    %s716 = scalar_lea.sflag [#allocation10], 1
    %717 = vsyncpa %s716, 1
    %718 = vsyncpa [#allocation8], 1
    %s719 = scalar_lea.sflag [#allocation8], 1
    %720 = vsyncpa %s719, 1

</llo_original>
